<compile_context>
chip_gen: v6e
topology: v6e:2x2x1
jax: 0.10.0
libtpu: 0.0.40
codegen_flags: <defaults>
</compile_context>

<pallas_src>
import functools

import numpy as np
import jax
import jax.numpy as jnp
from jax.experimental import pallas as pl
from jax.experimental.pallas import tpu as pltpu

LRELU_SLOPE = 0.01        # nn.LeakyReLU default negative_slope
BN_EPS = 1e-5             # nn.BatchNorm2d default eps
VMEM_TILE_BUDGET = 24 << 20
VMEM_LIMIT_BYTES = 40 << 20


def _round_up(x, m):
    return (x + m - 1) // m * m


# ------------------------------ tile selection ---------------------------------
def _pick_tile(dim, cap, mult):
    """Balanced tile size: fewest tiles with size <= cap, rounded to `mult`,
    minimizing zero padding (e.g. dim=600, cap=512 -> 304, not 512)."""
    dim_r = _round_up(dim, mult)
    if dim_r <= cap:
        return dim_r
    n_tiles = -(-dim // cap)
    return _round_up(-(-dim // n_tiles), mult)


def _fits_vmem(tm, tk, tn, budget=VMEM_TILE_BUDGET):
    a_b = 2 * tm * tk * 2          # bf16 A tile, double-buffered
    b_b = 2 * tk * tn * 2          # bf16 B tile, double-buffered
    o_b = 2 * tm * tn * 4          # f32 output tile, double-buffered
    v_b = 2 * 2 * (tn * 4) * 2     # scale + bias rows
    return a_b + b_b + o_b + v_b <= budget


def _choose_tiles(M, N, Kp):
    """Returns (tm, tn, single_k)."""
    for cap in (512, 256, 128, 64, 32, 16):
        tm = _pick_tile(M, cap, 16)
        tn = _pick_tile(N, max(cap, 128), 128)
        if _fits_vmem(tm, Kp, tn):
            return tm, tn, True
    return _pick_tile(M, 256, 16), _pick_tile(N, 256, 128), False


# --------------------------- fused GEMM kernel ----------------------------------
def _epilogue(acc, scale, bias, act):
    y = acc * scale + bias
    if act == "lrelu":
        y = jnp.where(y >= 0, y, LRELU_SLOPE * y)
    elif act == "relu":
        y = jnp.maximum(y, 0.0)
    elif act == "sigmoid":
        y = jax.nn.sigmoid(y)
    elif act == "tanh":
        y = jnp.tanh(y)
    return y


def _make_gemm_kernel(act, single_k):
    if single_k:
        # Full-K block: no accumulator scratch, no init/finalize branches.
        def kernel(a_ref, b_ref, s_ref, c_ref, o_ref):
            acc = jnp.dot(a_ref[...], b_ref[...],
                          preferred_element_type=jnp.float32)
            o_ref[...] = _epilogue(acc, s_ref[...], c_ref[...], act)
        return kernel

    # Fallback: K-tiled reduction with an f32 accumulator.
    def kernel(a_ref, b_ref, s_ref, c_ref, o_ref, acc_ref):
        @pl.when(pl.program_id(2) == 0)
        def _():
            acc_ref[...] = jnp.zeros_like(acc_ref)

        acc_ref[...] += jnp.dot(a_ref[...], b_ref[...],
                                preferred_element_type=jnp.float32)

        @pl.when(pl.program_id(2) == pl.num_programs(2) - 1)
        def _():
            o_ref[...] = _epilogue(acc_ref[...], s_ref[...], c_ref[...], act)
    return kernel


def pallas_matmul_fused(a, b, scale, bias, act="none"):
    """(M,K) @ (K,N) on the MXU in bf16 with f32 accumulation and a fused
    per-column scale/bias + activation epilogue.  Returns f32 (M, N)."""
    M, K = a.shape
    K2, N = b.shape
    assert K == K2

    a = a.astype(jnp.bfloat16)
    b = b.astype(jnp.bfloat16)
    scale = scale.astype(jnp.float32).reshape(1, N)
    bias = bias.astype(jnp.float32).reshape(1, N)

    Kp = _round_up(K, 128)
    tm, tn, single_k = _choose_tiles(M, N, Kp)
    Mp = _round_up(M, tm)
    Np = _round_up(N, tn)

    if (Mp, Kp) != (M, K):
        a = jnp.pad(a, ((0, Mp - M), (0, Kp - K)))
    if (Kp, Np) != (K, N):
        b = jnp.pad(b, ((0, Kp - K), (0, Np - N)))
    if Np != N:
        scale = jnp.pad(scale, ((0, 0), (0, Np - N)))
        bias = jnp.pad(bias, ((0, 0), (0, Np - N)))

    if single_k:
        # Grid: M-tiles outer, N-tiles inner -> the large A tile is DMA'd from
        # HBM exactly once; the small B/scale/bias tiles are re-read per M-tile.
        grid = (Mp // tm, Np // tn)
        out = pl.pallas_call(
            _make_gemm_kernel(act, True),
            out_shape=jax.ShapeDtypeStruct((Mp, Np), jnp.float32),
            grid_spec=pltpu.PrefetchScalarGridSpec(
                num_scalar_prefetch=0,
                grid=grid,
                in_specs=[
                    pl.BlockSpec((tm, Kp), lambda i, j: (i, 0)),
                    pl.BlockSpec((Kp, tn), lambda i, j: (0, j)),
                    pl.BlockSpec((1, tn), lambda i, j: (0, j)),
                    pl.BlockSpec((1, tn), lambda i, j: (0, j)),
                ],
                out_specs=pl.BlockSpec((tm, tn), lambda i, j: (i, j)),
            ),
            compiler_params=pltpu.CompilerParams(
                dimension_semantics=("parallel", "parallel"),
                vmem_limit_bytes=VMEM_LIMIT_BYTES),
        )(a, b, scale, bias)
    else:
        tk = 2048
        Kp2 = _round_up(Kp, tk)
        if Kp2 != Kp:
            a = jnp.pad(a, ((0, 0), (0, Kp2 - Kp)))
            b = jnp.pad(b, ((0, Kp2 - Kp), (0, 0)))
        grid = (Mp // tm, Np // tn, Kp2 // tk)
        out = pl.pallas_call(
            _make_gemm_kernel(act, False),
            out_shape=jax.ShapeDtypeStruct((Mp, Np), jnp.float32),
            grid_spec=pltpu.PrefetchScalarGridSpec(
                num_scalar_prefetch=0,
                grid=grid,
                in_specs=[
                    pl.BlockSpec((tm, tk), lambda i, j, k: (i, k)),
                    pl.BlockSpec((tk, tn), lambda i, j, k: (k, j)),
                    pl.BlockSpec((1, tn), lambda i, j, k: (0, j)),
                    pl.BlockSpec((1, tn), lambda i, j, k: (0, j)),
                ],
                out_specs=pl.BlockSpec((tm, tn), lambda i, j, k: (i, j)),
                scratch_shapes=[pltpu.VMEM((tm, tn), jnp.float32)],
            ),
            compiler_params=pltpu.CompilerParams(
                dimension_semantics=("parallel", "parallel", "arbitrary"),
                vmem_limit_bytes=VMEM_LIMIT_BYTES),
        )(a, b, scale, bias)

    return out[:M, :N]


# ------------------------------ im2col (slice-based) ----------------------------
def _im2col_real(x, kh, kw, sh, sw, ph, pw):
    """x (B,C,H,W) -> A (B*Ho*Wo, C*kh*kw) bf16, K ordered (c, dh, dw)."""
    B, C, H, W = x.shape
    Ho = (H + 2 * ph - kh) // sh + 1
    Wo = (W + 2 * pw - kw) // sw + 1
    xp = jnp.pad(x.astype(jnp.bfloat16), ((0, 0), (0, 0), (ph, ph), (pw, pw)))
    xp = xp.transpose(0, 2, 3, 1)                       # (B, Hp, Wp, C)
    cols = []
    for dh in range(kh):
        for dw in range(kw):
            cols.append(xp[:, dh:dh + sh * (Ho - 1) + 1:sh,
                           dw:dw + sw * (Wo - 1) + 1:sw, :])   # (B,Ho,Wo,C)
    pat = jnp.stack(cols, axis=-1)                      # (B,Ho,Wo,C,kh*kw)
    A = pat.reshape(B * Ho * Wo, C * kh * kw)
    return A, Ho, Wo


def _im2col_complex(x, kh, kw, sh, sw, ph, pw):
    """x (B,C,H,W,2) -> A (B*Ho*Wo, 2*C*kh*kw) bf16,
    K ordered ([real|imag], c, dh, dw)."""
    B, C, H, W, _ = x.shape
    Ho = (H + 2 * ph - kh) // sh + 1
    Wo = (W + 2 * pw - kw) // sw + 1
    xp = jnp.pad(x.astype(jnp.bfloat16),
                 ((0, 0), (0, 0), (ph, ph), (pw, pw), (0, 0)))
    xp = xp.transpose(0, 2, 3, 4, 1)                    # (B, Hp, Wp, 2, C)
    cols = []
    for dh in range(kh):
        for dw in range(kw):
            cols.append(xp[:, dh:dh + sh * (Ho - 1) + 1:sh,
                           dw:dw + sw * (Wo - 1) + 1:sw, :, :])  # (B,Ho,Wo,2,C)
    pat = jnp.stack(cols, axis=-1)                      # (B,Ho,Wo,2,C,kh*kw)
    A = pat.reshape(B * Ho * Wo, 2 * C * kh * kw)
    return A, Ho, Wo


# ------------------------------ Encoder forward ----------------------------------
def encoder_forward(x, params, *, kernel_size, stride, padding=None,
                    complex_mode=False):
    """Encoder.forward: conv -> (eval) BatchNorm -> LeakyReLU, fused into one
    im2col GEMM per call.

    real:    x (B, C, H, W)    -> (B, O, Ho, Wo)
    complex: x (B, C, H, W, 2) -> (B, O, Ho, Wo, 2)
    """
    kh, kw = kernel_size
    sh, sw = stride
    if padding is None:
        padding = tuple((k - 1) // 2 for k in kernel_size)
    ph, pw = padding

    if complex_mode:
        B, C, H, W, _ = x.shape
        O = params["wr"].shape[0]
        K = C * kh * kw
        A, Ho, Wo = _im2col_complex(x, kh, kw, sh, sw, ph, pw)     # (M, 2K)

        Wr = params["wr"].reshape(O, K).T                          # (K, O)
        Wi = params["wi"].reshape(O, K).T
        # columns [0:O] -> real output, [O:2O] -> imag output
        Wfull = jnp.concatenate(
            [jnp.concatenate([Wr, -Wi], axis=0),
             jnp.concatenate([Wi, Wr], axis=0)], axis=1)           # (2K, 2O)

        # TODO(synk): ComplexBatchNorm2d source not provided; fused here as
        # independent per-component eval-mode BatchNorm2d.
        s_r = params["bn_gamma_r"] / jnp.sqrt(params["bn_var_r"] + BN_EPS)
        s_i = params["bn_gamma_i"] / jnp.sqrt(params["bn_var_i"] + BN_EPS)
        b_r = (params["br"] - params["bn_mean_r"]) * s_r + params["bn_beta_r"]
        b_i = (params["bi"] - params["bn_mean_i"]) * s_i + params["bn_beta_i"]
        scale = jnp.concatenate([s_r, s_i])
        bias = jnp.concatenate([b_r, b_i])

        Y = pallas_matmul_fused(A, Wfull, scale, bias, act="lrelu")  # (M, 2O)
        yr = Y[:, :O].reshape(B, Ho, Wo, O).transpose(0, 3, 1, 2)
        yi = Y[:, O:].reshape(B, Ho, Wo, O).transpose(0, 3, 1, 2)
        return jnp.stack([yr, yi], axis=-1)

    # real path (nn.Conv2d + nn.BatchNorm2d + LeakyReLU)
    B, C, H, W = x.shape
    O = params["w"].shape[0]
    K = C * kh * kw
    A, Ho, Wo = _im2col_real(x, kh, kw, sh, sw, ph, pw)             # (M, K)
    Wm = params["w"].reshape(O, K).T
    s = params["bn_gamma"] / jnp.sqrt(params["bn_var"] + BN_EPS)
    bcol = (params["b"] - params["bn_mean"]) * s + params["bn_beta"]
    Y = pallas_matmul_fused(A, Wm, s, bcol, act="lrelu")            # (M, O)
    return Y.reshape(B, Ho, Wo, O).transpose(0, 3, 1, 2)


# ----------------------------- pure-JAX reference --------------------------------
def _conv2d_ref(x, w, stride, padding):
    return jax.lax.conv_general_dilated(
        x.astype(jnp.float32), w.astype(jnp.float32),
        window_strides=stride,
        padding=[(padding[0], padding[0]), (padding[1], padding[1])],
        dimension_numbers=("NCHW", "OIHW", "NCHW"),
        precision=jax.lax.Precision.HIGHEST)


def _bn_leaky_ref(y, gamma, beta, mean, var):
    y = (y - mean[None, :, None, None]) * (
        gamma[None, :, None, None] / jnp.sqrt(var + BN_EPS)[None, :, None, None]
    ) + beta[None, :, None, None]
    return jnp.where(y >= 0, y, LRELU_SLOPE * y)


def encoder_ref(x, p, *, kernel_size, stride, padding, complex_mode):
    del kernel_size
    if complex_mode:
        xr, xi = x[..., 0], x[..., 1]
        yr = (_conv2d_ref(xr, p["wr"], stride, padding)
              - _conv2d_ref(xi, p["wi"], stride, padding)
              + p["br"][None, :, None, None])
        yi = (_conv2d_ref(xr, p["wi"], stride, padding)
              + _conv2d_ref(xi, p["wr"], stride, padding)
              + p["bi"][None, :, None, None])
        yr = _bn_leaky_ref(yr, p["bn_gamma_r"], p["bn_beta_r"],
                           p["bn_mean_r"], p["bn_var_r"])
        yi = _bn_leaky_ref(yi, p["bn_gamma_i"], p["bn_beta_i"],
                           p["bn_mean_i"], p["bn_var_i"])
        return jnp.stack([yr, yi], axis=-1)
    y = _conv2d_ref(x, p["w"], stride, padding) + p["b"][None, :, None, None]
    return _bn_leaky_ref(y, p["bn_gamma"], p["bn_beta"],
                         p["bn_mean"], p["bn_var"])


# ------------------------------- parameter init ----------------------------------
def _bn_stats(key, cout, suffix, prm):
    k1, k2, k3, k4 = jax.random.split(key, 4)
    prm[f"bn_gamma{suffix}"] = 1.0 + 0.1 * jax.random.normal(k1, (cout,), jnp.float32)
    prm[f"bn_beta{suffix}"] = 0.1 * jax.random.normal(k2, (cout,), jnp.float32)
    prm[f"bn_mean{suffix}"] = 0.05 * jax.random.normal(k3, (cout,), jnp.float32)
    prm[f"bn_var{suffix}"] = 1.0 + 0.2 * jax.random.uniform(k4, (cout,), jnp.float32)
    return prm


def init_complex_encoder_params(key, cin, cout, ksize):
    kh, kw = ksize
    ks = jax.random.split(key, 6)
    wscale = 0.05
    p = dict(
        wr=wscale * jax.random.normal(ks[0], (cout, cin, kh, kw), jnp.float32),
        wi=wscale * jax.random.normal(ks[1], (cout, cin, kh, kw), jnp.float32),
        br=0.01 * jax.random.normal(ks[2], (cout,), jnp.float32),
        bi=0.01 * jax.random.normal(ks[3], (cout,), jnp.float32),
    )
    p = _bn_stats(ks[4], cout, "_r", p)
    p = _bn_stats(ks[5], cout, "_i", p)
    return p


def init_real_encoder_params(key, cin, cout, ksize):
    kh, kw = ksize
    ks = jax.random.split(key, 3)
    wscale = 0.05
    p = dict(
        w=wscale * jax.random.normal(ks[0], (cout, cin, kh, kw), jnp.float32),
        b=0.01 * jax.random.normal(ks[1], (cout,), jnp.float32),
    )
    return _bn_stats(ks[2], cout, "", p)


# --------------------------------------- main -------------------------------------
if __name__ == "__main__":
    key = jax.random.PRNGKey(0)
    k_in1, k_p1, k_in2, k_p2 = jax.random.split(key, 4)

    # --- Test 1: complex Encoder (FRCRN-style layer, reduced freq dim) ----------
    B, Cin, Cout = 2, 1, 16
    Fdim, Tdim = 33, 8
    ksize, strd, pad = (3, 3), (2, 1), (0, 1)
    x_c = 0.1 * jax.random.normal(k_in1, (B, Cin, Fdim, Tdim, 2), jnp.float32)
    p_c = init_complex_encoder_params(k_p1, Cin, Cout, ksize)
    enc_c = jax.jit(functools.partial(encoder_forward, kernel_size=ksize,
                                      stride=strd, padding=pad,
                                      complex_mode=True))
    y_c = jax.block_until_ready(enc_c(x_c, p_c))
    Ho = (Fdim + 2 * pad[0] - ksize[0]) // strd[0] + 1
    Wo = (Tdim + 2 * pad[1] - ksize[1]) // strd[1] + 1
    assert y_c.shape == (B, Cout, Ho, Wo, 2)
    y_c_ref = encoder_ref(x_c, p_c, kernel_size=ksize, stride=strd,
                          padding=pad, complex_mode=True)
    np.testing.assert_allclose(np.asarray(y_c), np.asarray(y_c_ref),
                               rtol=3e-2, atol=5e-3)

    # --- Test 2: real Encoder, PyTorch default padding ((k-1)//2) ---------------
    B2, C2, O2, H2, W2 = 2, 4, 8, 16, 16
    ksize2, strd2 = (3, 3), (1, 1)
    x_r = 0.1 * jax.random.normal(k_in2, (B2, C2, H2, W2), jnp.float32)
    p_r = init_real_encoder_params(k_p2, C2, O2, ksize2)
    enc_r = jax.jit(functools.partial(encoder_forward, kernel_size=ksize2,
                                      stride=strd2, padding=None,
                                      complex_mode=False))
    y_r = jax.block_until_ready(enc_r(x_r, p_r))
    assert y_r.shape == (B2, O2, H2, W2)
    y_r_ref = encoder_ref(x_r, p_r, kernel_size=ksize2, stride=strd2,
                          padding=(1, 1), complex_mode=False)
    np.testing.assert_allclose(np.asarray(y_r), np.asarray(y_r_ref),
                               rtol=3e-2, atol=5e-3)

    assert bool(jnp.all(jnp.isfinite(y_c))) and bool(jnp.all(jnp.isfinite(y_r)))
    print("KERNEL_OK")
</pallas_src>

<mosaic_0001>
module attributes {stable_mosaic.version = 11 : i64} {
  func.func @kernel(%arg0: i32, %arg1: i32, %arg2: memref<256x128xbf16, #tpu.memory_space<vmem>>, %arg3: memref<128x128xbf16, #tpu.memory_space<vmem>>, %arg4: memref<1x128xf32, #tpu.memory_space<vmem>>, %arg5: memref<1x128xf32, #tpu.memory_space<vmem>>, %arg6: memref<256x128xf32, #tpu.memory_space<vmem>>) attributes {dimension_semantics = [#tpu.dimension_semantics<parallel>, #tpu.dimension_semantics<parallel>], iteration_bounds = array<i64: 1, 1>, scalar_prefetch = 0 : i64, scratch_operands = 0 : i64, tpu.core_type = #tpu.core_type<tc>, window_params = [{transform_indices = @transform_0, window_bounds = array<i64: 256, 128>}, {transform_indices = @transform_1, window_bounds = array<i64: 128, 128>}, {transform_indices = @transform_2, window_bounds = array<i64: 1, 128>}, {transform_indices = @transform_3, window_bounds = array<i64: 1, 128>}, {transform_indices = @transform_4, window_bounds = array<i64: 256, 128>}]} {
    %c0 = arith.constant 0 : index
    %c0_0 = arith.constant 0 : index
    %0 = vector.load %arg2[%c0, %c0_0] : memref<256x128xbf16, #tpu.memory_space<vmem>>, vector<256x128xbf16>
    %c0_1 = arith.constant 0 : index
    %c0_2 = arith.constant 0 : index
    %1 = vector.load %arg3[%c0_1, %c0_2] : memref<128x128xbf16, #tpu.memory_space<vmem>>, vector<128x128xbf16>
    %cst = arith.constant dense<0.000000e+00> : vector<256x128xf32>
    %2 = tpu.matmul %0, %1, %cst {dimension_numbers = #tpu.dot_dimension_numbers<[1], [0], [0], [1], [0, 0, 1, 1], [], []>} : vector<256x128xbf16>, vector<128x128xbf16>, vector<256x128xf32> -> vector<256x128xf32>
    %c0_3 = arith.constant 0 : index
    %c0_4 = arith.constant 0 : index
    %3 = vector.load %arg4[%c0_3, %c0_4] : memref<1x128xf32, #tpu.memory_space<vmem>>, vector<1x128xf32>
    %c0_5 = arith.constant 0 : index
    %c0_6 = arith.constant 0 : index
    %4 = vector.load %arg5[%c0_5, %c0_6] : memref<1x128xf32, #tpu.memory_space<vmem>>, vector<1x128xf32>
    %5 = vector.broadcast %3 : vector<1x128xf32> to vector<256x128xf32>
    %6 = arith.mulf %2, %5 : vector<256x128xf32>
    %7 = vector.broadcast %4 : vector<1x128xf32> to vector<256x128xf32>
    %8 = arith.addf %6, %7 : vector<256x128xf32>
    %cst_7 = arith.constant 0.000000e+00 : f32
    %9 = vector.broadcast %cst_7 : f32 to vector<256x128xf32>
    %10 = arith.cmpf oge, %8, %9 : vector<256x128xf32>
    %cst_8 = arith.constant 0.00999999977 : f32
    %11 = vector.broadcast %cst_8 : f32 to vector<256x128xf32>
    %12 = arith.mulf %11, %8 : vector<256x128xf32>
    %13 = arith.select %10, %8, %12 : vector<256x128xi1>, vector<256x128xf32>
    %c0_9 = arith.constant 0 : index
    %c0_10 = arith.constant 0 : index
    %14 = vector.load %arg6[%c0_9, %c0_10] : memref<256x128xf32, #tpu.memory_space<vmem>>, vector<256x128xf32>
    tpu.vector_store %arg6[%c0_9, %c0_10], %13 {strides = array<i32>} : memref<256x128xf32, #tpu.memory_space<vmem>>, vector<256x128xf32>,
    return
  }
  func.func @transform_0(%arg0: i32, %arg1: i32) -> (i32, i32) {
    %c0_i32 = arith.constant 0 : i32
    %c0_i32_0 = arith.constant 0 : i32
    return %arg0, %c0_i32 : i32, i32
  }
  func.func @transform_1(%arg0: i32, %arg1: i32) -> (i32, i32) {
    %c0_i32 = arith.constant 0 : i32
    %c0_i32_0 = arith.constant 0 : i32
    return %c0_i32, %arg1 : i32, i32
  }
  func.func @transform_2(%arg0: i32, %arg1: i32) -> (i32, i32) {
    %c0_i32 = arith.constant 0 : i32
    %c0_i32_0 = arith.constant 0 : i32
    return %c0_i32, %arg1 : i32, i32
  }
  func.func @transform_3(%arg0: i32, %arg1: i32) -> (i32, i32) {
    %c0_i32 = arith.constant 0 : i32
    %c0_i32_0 = arith.constant 0 : i32
    return %c0_i32, %arg1 : i32, i32
  }
  func.func @transform_4(%arg0: i32, %arg1: i32) -> (i32, i32) {
    %c0_i32 = arith.constant 0 : i32
    return %arg0, %arg1 : i32, i32
  }
}

</mosaic_0001>

<llo_original>
// kernel: encoder_forward.1
$region0: #{encoder_forward.1}
  #allocation0 [shape = 'u32[]', space=smem, size = 0x4, offset = 0x4, fixed_abs, tag = 'smem constant byte address 0x4 - core index']
  #allocation1 [shape = 'u32[144,128]{1,0:T(1,128)}', space=vmem, size = 0x12000, scoped, tag = 'internal scratch']
  %s0 = inlined_call_operand.vmem [shape: bf16[256,128], index: 0, kind: input, shape index: {}]
  %s1 = inlined_call_operand.vmem [shape: bf16[128,128], index: 1, kind: input, shape index: {}]
  %s2 = inlined_call_operand.vmem [shape: f32[1,128], index: 2, kind: input, shape index: {}]
  %s3 = inlined_call_operand.vmem [shape: f32[1,128], index: 3, kind: input, shape index: {}]
  %s4 = inlined_call_operand.vmem [shape: f32[256,128], index: 4, kind: output, shape index: {}]
  %s5 = sld [smem:[#allocation0]]
  $region26: #{encoder_forward.1} parent=0
    _
  %s7 = ssub.s32 1, %s5
  %s8 = scalar_select 0, %s7, %s5
  // Predicated region
  $region2: #{encoder_forward.1} parent=0 // pred_check
    _
  $region3: #{encoder_forward.1} parent=0 // pred_check_branch
    %10 = sbr.rel (0) target = $region5
  $region4: #{encoder_forward.1} parent=0 // pred_region
    _
  $region5: #{encoder_forward.1} parent=0 // pred_fallthru
    _
  // Predicated region
  $region6: #{encoder_forward.1} parent=0 // pred_check
    _
  $region7: #{encoder_forward.1} parent=0 // pred_check_branch
    %12 = sbr.rel (0) target = $region9
  $region8: #{encoder_forward.1} parent=0 // pred_region
    _
  $region9: #{encoder_forward.1} parent=0 // pred_fallthru
    _
  // Predicated region
  $region10: #{encoder_forward.1} parent=0 // pred_check
    _
  $region11: #{encoder_forward.1} parent=0 // pred_check_branch
    %14 = sbr.rel (0) target = $region13
  $region12: #{encoder_forward.1} parent=0 // pred_region
    _
  $region13: #{encoder_forward.1} parent=0 // pred_fallthru
    _
  // Predicated region
  $region14: #{encoder_forward.1} parent=0 // pred_check
    _
  $region15: #{encoder_forward.1} parent=0 // pred_check_branch
    %16 = sbr.rel (0) target = $region17
  $region16: #{encoder_forward.1} parent=0 // pred_region
    _
  $region17: #{encoder_forward.1} parent=0 // pred_fallthru
    _
  %v18 = vld [vmem:[%s0] sm:$0xf]
  %v19 = vld [vmem:[%s0 + $0x4] sm:$0xf]
  %v20 = vld [vmem:[%s0 + $0x8] sm:$0xf]
  %v21 = vld [vmem:[%s0 + $0xc] sm:$0xf]
  %v22 = vld [vmem:[%s0 + $0x10] sm:$0xf]
  %v23 = vld [vmem:[%s0 + $0x14] sm:$0xf]
  %v24 = vld [vmem:[%s0 + $0x18] sm:$0xf]
  %v25 = vld [vmem:[%s0 + $0x1c] sm:$0xf]
  %v26 = vld [vmem:[%s0 + $0x20] sm:$0xf]
  %v27 = vld [vmem:[%s0 + $0x24] sm:$0xf]
  %v28 = vld [vmem:[%s0 + $0x28] sm:$0xf]
  %v29 = vld [vmem:[%s0 + $0x2c] sm:$0xf]
  %v30 = vld [vmem:[%s0 + $0x30] sm:$0xf]
  %v31 = vld [vmem:[%s0 + $0x34] sm:$0xf]
  %v32 = vld [vmem:[%s0 + $0x38] sm:$0xf]
  %v33 = vld [vmem:[%s0 + $0x3c] sm:$0xf]
  %v34 = vld [vmem:[%s0 + $0x40] sm:$0xf]
  %v35 = vld [vmem:[%s0 + $0x44] sm:$0xf]
  %v36 = vld [vmem:[%s0 + $0x48] sm:$0xf]
  %v37 = vld [vmem:[%s0 + $0x4c] sm:$0xf]
  %v38 = vld [vmem:[%s0 + $0x50] sm:$0xf]
  %v39 = vld [vmem:[%s0 + $0x54] sm:$0xf]
  %v40 = vld [vmem:[%s0 + $0x58] sm:$0xf]
  %v41 = vld [vmem:[%s0 + $0x5c] sm:$0xf]
  %v42 = vld [vmem:[%s0 + $0x60] sm:$0xf]
  %v43 = vld [vmem:[%s0 + $0x64] sm:$0xf]
  %v44 = vld [vmem:[%s0 + $0x68] sm:$0xf]
  %v45 = vld [vmem:[%s0 + $0x6c] sm:$0xf]
  %v46 = vld [vmem:[%s0 + $0x70] sm:$0xf]
  %v47 = vld [vmem:[%s0 + $0x74] sm:$0xf]
  %v48 = vld [vmem:[%s0 + $0x78] sm:$0xf]
  %v49 = vld [vmem:[%s0 + $0x7c] sm:$0xf]
  %v50 = vld [vmem:[%s1] sm:$0xf]
  %v51 = vld [vmem:[%s1 + $0x4] sm:$0xf]
  %v52 = vld [vmem:[%s1 + $0x8] sm:$0xf]
  %v53 = vld [vmem:[%s1 + $0xc] sm:$0xf]
  %v54 = vld [vmem:[%s1 + $0x10] sm:$0xf]
  %v55 = vld [vmem:[%s1 + $0x14] sm:$0xf]
  %v56 = vld [vmem:[%s1 + $0x18] sm:$0xf]
  %v57 = vld [vmem:[%s1 + $0x1c] sm:$0xf]
  %v58 = vld [vmem:[%s1 + $0x20] sm:$0xf]
  %v59 = vld [vmem:[%s1 + $0x24] sm:$0xf]
  %v60 = vld [vmem:[%s1 + $0x28] sm:$0xf]
  %v61 = vld [vmem:[%s1 + $0x2c] sm:$0xf]
  %v62 = vld [vmem:[%s1 + $0x30] sm:$0xf]
  %v63 = vld [vmem:[%s1 + $0x34] sm:$0xf]
  %v64 = vld [vmem:[%s1 + $0x38] sm:$0xf]
  %v65 = vld [vmem:[%s1 + $0x3c] sm:$0xf]
  %v98 = vunpack.c.l.b16 %v18
  %v99 = vunpack.c.l.b16 %v19
  %v100 = vunpack.c.l.b16 %v20
  %v101 = vunpack.c.l.b16 %v21
  %v102 = vunpack.c.l.b16 %v22
  %v103 = vunpack.c.l.b16 %v23
  %v104 = vunpack.c.l.b16 %v24
  %v105 = vunpack.c.l.b16 %v25
  %v106 = vunpack.c.l.b16 %v26
  %v107 = vunpack.c.l.b16 %v27
  %v108 = vunpack.c.l.b16 %v28
  %v109 = vunpack.c.l.b16 %v29
  %v110 = vunpack.c.l.b16 %v30
  %v111 = vunpack.c.l.b16 %v31
  %v112 = vunpack.c.l.b16 %v32
  %v113 = vunpack.c.l.b16 %v33
  %v114 = vunpack.c.l.b16 %v34
  %v115 = vunpack.c.l.b16 %v35
  %v116 = vunpack.c.l.b16 %v36
  %v117 = vunpack.c.l.b16 %v37
  %v118 = vunpack.c.l.b16 %v38
  %v119 = vunpack.c.l.b16 %v39
  %v120 = vunpack.c.l.b16 %v40
  %v121 = vunpack.c.l.b16 %v41
  %v122 = vunpack.c.l.b16 %v42
  %v123 = vunpack.c.l.b16 %v43
  %v124 = vunpack.c.l.b16 %v44
  %v125 = vunpack.c.l.b16 %v45
  %v126 = vunpack.c.l.b16 %v46
  %v127 = vunpack.c.l.b16 %v47
  %v128 = vunpack.c.l.b16 %v48
  %v129 = vunpack.c.l.b16 %v49
  %v130 = vpack.c.b16 %v99, %v98
  %v131 = vpack.c.b16 %v101, %v100
  %v132 = vpack.c.b16 %v103, %v102
  %v133 = vpack.c.b16 %v105, %v104
  %v134 = vpack.c.b16 %v107, %v106
  %v135 = vpack.c.b16 %v109, %v108
  %v136 = vpack.c.b16 %v111, %v110
  %v137 = vpack.c.b16 %v113, %v112
  %v138 = vpack.c.b16 %v115, %v114
  %v139 = vpack.c.b16 %v117, %v116
  %v140 = vpack.c.b16 %v119, %v118
  %v141 = vpack.c.b16 %v121, %v120
  %v142 = vpack.c.b16 %v123, %v122
  %v143 = vpack.c.b16 %v125, %v124
  %v144 = vpack.c.b16 %v127, %v126
  %v145 = vpack.c.b16 %v129, %v128
  %v178 = vunpack.c.l.b16 %v50
  %v179 = vunpack.c.l.b16 %v51
  %v180 = vunpack.c.l.b16 %v52
  %v181 = vunpack.c.l.b16 %v53
  %v182 = vunpack.c.l.b16 %v54
  %v183 = vunpack.c.l.b16 %v55
  %v184 = vunpack.c.l.b16 %v56
  %v185 = vunpack.c.l.b16 %v57
  %v186 = vunpack.c.l.b16 %v58
  %v187 = vunpack.c.l.b16 %v59
  %v188 = vunpack.c.l.b16 %v60
  %v189 = vunpack.c.l.b16 %v61
  %v190 = vunpack.c.l.b16 %v62
  %v191 = vunpack.c.l.b16 %v63
  %v192 = vunpack.c.l.b16 %v64
  %v193 = vunpack.c.l.b16 %v65
  %v194 = vpack.c.b16 %v179, %v178
  %v195 = vpack.c.b16 %v181, %v180
  %v196 = vpack.c.b16 %v183, %v182
  %v197 = vpack.c.b16 %v185, %v184
  %v198 = vpack.c.b16 %v187, %v186
  %v199 = vpack.c.b16 %v189, %v188
  %v200 = vpack.c.b16 %v191, %v190
  %v201 = vpack.c.b16 %v193, %v192
  %210 = vmatprep.subr.bf16.mxu0 0
  %211 = vmatpush1.bf16.msra.mxu0 %v201
  %212 = vmatprep.subr.bf16.mxu0 0
  %213 = vmatpush1.bf16.msra.mxu0 %v200
  %214 = vmatprep.subr.bf16.mxu0 0
  %215 = vmatpush1.bf16.msra.mxu0 %v199
  %216 = vmatprep.subr.bf16.mxu0 0
  %217 = vmatpush1.bf16.msra.mxu0 %v198
  %218 = vmatprep.subr.bf16.mxu0 0
  %219 = vmatpush1.bf16.msra.mxu0 %v197
  %220 = vmatprep.subr.bf16.mxu0 0
  %221 = vmatpush1.bf16.msra.mxu0 %v196
  %222 = vmatprep.subr.bf16.mxu0 0
  %223 = vmatpush1.bf16.msra.mxu0 %v195
  %224 = vmatprep.subr.bf16.mxu0 0
  %225 = vmatpush1.bf16.msra.mxu0 %v194
  %226 = vmatprep.subr.bf16.mxu0 0
  %227 = vmatpush2.bf16.msra.mxu0 0
  %228 = vmatprep.subr.bf16.mxu0 0
  %229 = vmatpush2.bf16.msra.mxu0 0
  %230 = vmatprep.subr.bf16.mxu0 0
  %231 = vmatpush2.bf16.msra.mxu0 0
  %232 = vmatprep.subr.bf16.mxu0 0
  %233 = vmatpush2.bf16.msra.mxu0 0
  %234 = vmatprep.subr.bf16.mxu0 0
  %235 = vmatpush2.bf16.msra.mxu0 0
  %236 = vmatprep.subr.bf16.mxu0 0
  %237 = vmatpush2.bf16.msra.mxu0 0
  %238 = vmatprep.subr.bf16.mxu0 0
  %239 = vmatpush2.bf16.msra.mxu0 0
  %240 = vmatprep.subr.bf16.mxu0 0
  %241 = vmatpush2.bf16.msra.mxu0 0
  %242 = vmatprep.mubr.bf16.mxu0 0
  %243 = vmatmul.mubr.bf16.gmra.mxu0 %v130
  %v244 = vpop.f32.mrf.mxu0
  %v245 = vadd.f32 0.0, %v244
  %v246 = vpop.f32.mrf.mxu0
  %v247 = vpop.f32.mrf.mxu0
  %v248 = vadd.f32 0.0, %v247
  %v249 = vpop.f32.mrf.mxu0
  %250 = vmatprep.mubr.bf16.mxu0 0
  %251 = vmatmul.mubr.bf16.gmra.mxu0 %v131
  %v252 = vpop.f32.mrf.mxu0
  %v253 = vadd.f32 0.0, %v252
  %v254 = vpop.f32.mrf.mxu0
  %v255 = vpop.f32.mrf.mxu0
  %v256 = vadd.f32 0.0, %v255
  %v257 = vpop.f32.mrf.mxu0
  %258 = vmatprep.mubr.bf16.mxu0 0
  %259 = vmatmul.mubr.bf16.gmra.mxu0 %v132
  %v260 = vpop.f32.mrf.mxu0
  %v261 = vadd.f32 0.0, %v260
  %v262 = vpop.f32.mrf.mxu0
  %v263 = vpop.f32.mrf.mxu0
  %v264 = vadd.f32 0.0, %v263
  %v265 = vpop.f32.mrf.mxu0
  %266 = vmatprep.mubr.bf16.mxu0 0
  %267 = vmatmul.mubr.bf16.gmra.mxu0 %v133
  %v268 = vpop.f32.mrf.mxu0
  %v269 = vadd.f32 0.0, %v268
  %v270 = vpop.f32.mrf.mxu0
  %v271 = vpop.f32.mrf.mxu0
  %v272 = vadd.f32 0.0, %v271
  %v273 = vpop.f32.mrf.mxu0
  %274 = vmatprep.mubr.bf16.mxu0 0
  %275 = vmatmul.mubr.bf16.gmra.mxu0 %v134
  %v276 = vpop.f32.mrf.mxu0
  %v277 = vadd.f32 0.0, %v276
  %v278 = vpop.f32.mrf.mxu0
  %v279 = vpop.f32.mrf.mxu0
  %v280 = vadd.f32 0.0, %v279
  %v281 = vpop.f32.mrf.mxu0
  %282 = vmatprep.mubr.bf16.mxu0 0
  %283 = vmatmul.mubr.bf16.gmra.mxu0 %v135
  %v284 = vpop.f32.mrf.mxu0
  %v285 = vadd.f32 0.0, %v284
  %v286 = vpop.f32.mrf.mxu0
  %v287 = vpop.f32.mrf.mxu0
  %v288 = vadd.f32 0.0, %v287
  %v289 = vpop.f32.mrf.mxu0
  %290 = vmatprep.mubr.bf16.mxu0 0
  %291 = vmatmul.mubr.bf16.gmra.mxu0 %v136
  %v292 = vpop.f32.mrf.mxu0
  %v293 = vadd.f32 0.0, %v292
  %v294 = vpop.f32.mrf.mxu0
  %v295 = vpop.f32.mrf.mxu0
  %v296 = vadd.f32 0.0, %v295
  %v297 = vpop.f32.mrf.mxu0
  %298 = vmatprep.mubr.bf16.mxu0 0
  %299 = vmatmul.mubr.bf16.gmra.mxu0 %v137
  %v300 = vpop.f32.mrf.mxu0
  %v301 = vadd.f32 0.0, %v300
  %v302 = vpop.f32.mrf.mxu0
  %v303 = vpop.f32.mrf.mxu0
  %v304 = vadd.f32 0.0, %v303
  %v305 = vpop.f32.mrf.mxu0
  %306 = vmatprep.mubr.bf16.mxu0 0
  %307 = vmatmul.mubr.bf16.gmra.mxu0 %v138
  %v308 = vpop.f32.mrf.mxu0
  %v309 = vadd.f32 0.0, %v308
  %v310 = vpop.f32.mrf.mxu0
  %v311 = vpop.f32.mrf.mxu0
  %v312 = vadd.f32 0.0, %v311
  %v313 = vpop.f32.mrf.mxu0
  %314 = vmatprep.mubr.bf16.mxu0 0
  %315 = vmatmul.mubr.bf16.gmra.mxu0 %v139
  %v316 = vpop.f32.mrf.mxu0
  %v317 = vadd.f32 0.0, %v316
  %v318 = vpop.f32.mrf.mxu0
  %v319 = vpop.f32.mrf.mxu0
  %v320 = vadd.f32 0.0, %v319
  %v321 = vpop.f32.mrf.mxu0
  %322 = vmatprep.mubr.bf16.mxu0 0
  %323 = vmatmul.mubr.bf16.gmra.mxu0 %v140
  %v324 = vpop.f32.mrf.mxu0
  %v325 = vadd.f32 0.0, %v324
  %v326 = vpop.f32.mrf.mxu0
  %v327 = vpop.f32.mrf.mxu0
  %v328 = vadd.f32 0.0, %v327
  %v329 = vpop.f32.mrf.mxu0
  %330 = vmatprep.mubr.bf16.mxu0 0
  %331 = vmatmul.mubr.bf16.gmra.mxu0 %v141
  %v332 = vpop.f32.mrf.mxu0
  %v333 = vadd.f32 0.0, %v332
  %v334 = vpop.f32.mrf.mxu0
  %v335 = vpop.f32.mrf.mxu0
  %v336 = vadd.f32 0.0, %v335
  %v337 = vpop.f32.mrf.mxu0
  %338 = vmatprep.mubr.bf16.mxu0 0
  %339 = vmatmul.mubr.bf16.gmra.mxu0 %v142
  %v340 = vpop.f32.mrf.mxu0
  %v341 = vadd.f32 0.0, %v340
  %v342 = vpop.f32.mrf.mxu0
  %v343 = vpop.f32.mrf.mxu0
  %v344 = vadd.f32 0.0, %v343
  %v345 = vpop.f32.mrf.mxu0
  %346 = vmatprep.mubr.bf16.mxu0 0
  %347 = vmatmul.mubr.bf16.gmra.mxu0 %v143
  %v348 = vpop.f32.mrf.mxu0
  %v349 = vadd.f32 0.0, %v348
  %v350 = vpop.f32.mrf.mxu0
  %v351 = vpop.f32.mrf.mxu0
  %v352 = vadd.f32 0.0, %v351
  %v353 = vpop.f32.mrf.mxu0
  %354 = vmatprep.mubr.bf16.mxu0 0
  %355 = vmatmul.mubr.bf16.gmra.mxu0 %v144
  %v356 = vpop.f32.mrf.mxu0
  %v357 = vadd.f32 0.0, %v356
  %v358 = vpop.f32.mrf.mxu0
  %v359 = vpop.f32.mrf.mxu0
  %v360 = vadd.f32 0.0, %v359
  %v361 = vpop.f32.mrf.mxu0
  %362 = vmatprep.mubr.bf16.mxu0 0
  %363 = vmatmul.mubr.bf16.gmra.mxu0 %v145
  %v364 = vpop.f32.mrf.mxu0
  %v365 = vadd.f32 0.0, %v364
  %v366 = vpop.f32.mrf.mxu0
  %v367 = vpop.f32.mrf.mxu0
  %v368 = vadd.f32 0.0, %v367
  %v369 = vpop.f32.mrf.mxu0
  %370 = vdwg.mxu0
  %v371 = vld [vmem:[%s2] sm:$0x1]
  %v372 = vld [vmem:[%s3] sm:$0x1]
  %v374 = vlaneseq
  %v375 = vshrl.u32 %v374, 7
  %v376 = vsub.s32 0, %v375
  %v377 = vrot.slane %v371, %v376
  %v379 = vmul.f32 %v245, %v377
  %v380 = vmul.f32 %v248, %v377
  %v381 = vmul.f32 %v253, %v377
  %v382 = vmul.f32 %v256, %v377
  %v383 = vmul.f32 %v261, %v377
  %v384 = vmul.f32 %v264, %v377
  %v385 = vmul.f32 %v269, %v377
  %v386 = vmul.f32 %v272, %v377
  %v387 = vmul.f32 %v277, %v377
  %v388 = vmul.f32 %v280, %v377
  %v389 = vmul.f32 %v285, %v377
  %v390 = vmul.f32 %v288, %v377
  %v391 = vmul.f32 %v293, %v377
  %v392 = vmul.f32 %v296, %v377
  %v393 = vmul.f32 %v301, %v377
  %v394 = vmul.f32 %v304, %v377
  %v395 = vmul.f32 %v309, %v377
  %v396 = vmul.f32 %v312, %v377
  %v397 = vmul.f32 %v317, %v377
  %v398 = vmul.f32 %v320, %v377
  %v399 = vmul.f32 %v325, %v377
  %v400 = vmul.f32 %v328, %v377
  %v401 = vmul.f32 %v333, %v377
  %v402 = vmul.f32 %v336, %v377
  %v403 = vmul.f32 %v341, %v377
  %v404 = vmul.f32 %v344, %v377
  %v405 = vmul.f32 %v349, %v377
  %v406 = vmul.f32 %v352, %v377
  %v407 = vmul.f32 %v357, %v377
  %v408 = vmul.f32 %v360, %v377
  %v409 = vmul.f32 %v365, %v377
  %v410 = vmul.f32 %v368, %v377
  %v412 = vlaneseq
  %v413 = vshrl.u32 %v412, 7
  %v414 = vsub.s32 0, %v413
  %v415 = vrot.slane %v372, %v414
  %v417 = vadd.f32 %v379, %v415
  %v418 = vadd.f32 %v380, %v415
  %v419 = vadd.f32 %v381, %v415
  %v420 = vadd.f32 %v382, %v415
  %v421 = vadd.f32 %v383, %v415
  %v422 = vadd.f32 %v384, %v415
  %v423 = vadd.f32 %v385, %v415
  %v424 = vadd.f32 %v386, %v415
  %v425 = vadd.f32 %v387, %v415
  %v426 = vadd.f32 %v388, %v415
  %v427 = vadd.f32 %v389, %v415
  %v428 = vadd.f32 %v390, %v415
  %v429 = vadd.f32 %v391, %v415
  %v430 = vadd.f32 %v392, %v415
  %v431 = vadd.f32 %v393, %v415
  %v432 = vadd.f32 %v394, %v415
  %v433 = vadd.f32 %v395, %v415
  %v434 = vadd.f32 %v396, %v415
  %v435 = vadd.f32 %v397, %v415
  %v436 = vadd.f32 %v398, %v415
  %v437 = vadd.f32 %v399, %v415
  %v438 = vadd.f32 %v400, %v415
  %v439 = vadd.f32 %v401, %v415
  %v440 = vadd.f32 %v402, %v415
  %v441 = vadd.f32 %v403, %v415
  %v442 = vadd.f32 %v404, %v415
  %v443 = vadd.f32 %v405, %v415
  %v444 = vadd.f32 %v406, %v415
  %v445 = vadd.f32 %v407, %v415
  %v446 = vadd.f32 %v408, %v415
  %v447 = vadd.f32 %v409, %v415
  %v448 = vadd.f32 %v410, %v415
  %vm449 = vcmp.ge.f32.partialorder %v417, 0.0
  %vm450 = vcmp.ge.f32.partialorder %v418, 0.0
  %vm451 = vcmp.ge.f32.partialorder %v419, 0.0
  %vm452 = vcmp.ge.f32.partialorder %v420, 0.0
  %vm453 = vcmp.ge.f32.partialorder %v421, 0.0
  %vm454 = vcmp.ge.f32.partialorder %v422, 0.0
  %vm455 = vcmp.ge.f32.partialorder %v423, 0.0
  %vm456 = vcmp.ge.f32.partialorder %v424, 0.0
  %vm457 = vcmp.ge.f32.partialorder %v425, 0.0
  %vm458 = vcmp.ge.f32.partialorder %v426, 0.0
  %vm459 = vcmp.ge.f32.partialorder %v427, 0.0
  %vm460 = vcmp.ge.f32.partialorder %v428, 0.0
  %vm461 = vcmp.ge.f32.partialorder %v429, 0.0
  %vm462 = vcmp.ge.f32.partialorder %v430, 0.0
  %vm463 = vcmp.ge.f32.partialorder %v431, 0.0
  %vm464 = vcmp.ge.f32.partialorder %v432, 0.0
  %vm465 = vcmp.ge.f32.partialorder %v433, 0.0
  %vm466 = vcmp.ge.f32.partialorder %v434, 0.0
  %vm467 = vcmp.ge.f32.partialorder %v435, 0.0
  %vm468 = vcmp.ge.f32.partialorder %v436, 0.0
  %vm469 = vcmp.ge.f32.partialorder %v437, 0.0
  %vm470 = vcmp.ge.f32.partialorder %v438, 0.0
  %vm471 = vcmp.ge.f32.partialorder %v439, 0.0
  %vm472 = vcmp.ge.f32.partialorder %v440, 0.0
  %vm473 = vcmp.ge.f32.partialorder %v441, 0.0
  %vm474 = vcmp.ge.f32.partialorder %v442, 0.0
  %vm475 = vcmp.ge.f32.partialorder %v443, 0.0
  %vm476 = vcmp.ge.f32.partialorder %v444, 0.0
  %vm477 = vcmp.ge.f32.partialorder %v445, 0.0
  %vm478 = vcmp.ge.f32.partialorder %v446, 0.0
  %vm479 = vcmp.ge.f32.partialorder %v447, 0.0
  %vm480 = vcmp.ge.f32.partialorder %v448, 0.0
  %v481 = vmul.f32 %v417, 0.01
  %v482 = vmul.f32 %v418, 0.01
  %v483 = vmul.f32 %v419, 0.01
  %v484 = vmul.f32 %v420, 0.01
  %v485 = vmul.f32 %v421, 0.01
  %v486 = vmul.f32 %v422, 0.01
  %v487 = vmul.f32 %v423, 0.01
  %v488 = vmul.f32 %v424, 0.01
  %v489 = vmul.f32 %v425, 0.01
  %v490 = vmul.f32 %v426, 0.01
  %v491 = vmul.f32 %v427, 0.01
  %v492 = vmul.f32 %v428, 0.01
  %v493 = vmul.f32 %v429, 0.01
  %v494 = vmul.f32 %v430, 0.01
  %v495 = vmul.f32 %v431, 0.01
  %v496 = vmul.f32 %v432, 0.01
  %v497 = vmul.f32 %v433, 0.01
  %v498 = vmul.f32 %v434, 0.01
  %v499 = vmul.f32 %v435, 0.01
  %v500 = vmul.f32 %v436, 0.01
  %v501 = vmul.f32 %v437, 0.01
  %v502 = vmul.f32 %v438, 0.01
  %v503 = vmul.f32 %v439, 0.01
  %v504 = vmul.f32 %v440, 0.01
  %v505 = vmul.f32 %v441, 0.01
  %v506 = vmul.f32 %v442, 0.01
  %v507 = vmul.f32 %v443, 0.01
  %v508 = vmul.f32 %v444, 0.01
  %v509 = vmul.f32 %v445, 0.01
  %v510 = vmul.f32 %v446, 0.01
  %v511 = vmul.f32 %v447, 0.01
  %v512 = vmul.f32 %v448, 0.01
  %v513 = vsel %vm449, %v417, %v481
  %v514 = vsel %vm450, %v418, %v482
  %v515 = vsel %vm451, %v419, %v483
  %v516 = vsel %vm452, %v420, %v484
  %v517 = vsel %vm453, %v421, %v485
  %v518 = vsel %vm454, %v422, %v486
  %v519 = vsel %vm455, %v423, %v487
  %v520 = vsel %vm456, %v424, %v488
  %v521 = vsel %vm457, %v425, %v489
  %v522 = vsel %vm458, %v426, %v490
  %v523 = vsel %vm459, %v427, %v491
  %v524 = vsel %vm460, %v428, %v492
  %v525 = vsel %vm461, %v429, %v493
  %v526 = vsel %vm462, %v430, %v494
  %v527 = vsel %vm463, %v431, %v495
  %v528 = vsel %vm464, %v432, %v496
  %v529 = vsel %vm465, %v433, %v497
  %v530 = vsel %vm466, %v434, %v498
  %v531 = vsel %vm467, %v435, %v499
  %v532 = vsel %vm468, %v436, %v500
  %v533 = vsel %vm469, %v437, %v501
  %v534 = vsel %vm470, %v438, %v502
  %v535 = vsel %vm471, %v439, %v503
  %v536 = vsel %vm472, %v440, %v504
  %v537 = vsel %vm473, %v441, %v505
  %v538 = vsel %vm474, %v442, %v506
  %v539 = vsel %vm475, %v443, %v507
  %v540 = vsel %vm476, %v444, %v508
  %v541 = vsel %vm477, %v445, %v509
  %v542 = vsel %vm478, %v446, %v510
  %v543 = vsel %vm479, %v447, %v511
  %v544 = vsel %vm480, %v448, %v512
  %545 = vst [vmem:[%s4] sm:$0xff] %v513
  %546 = vst [vmem:[%s4 + $0x8] sm:$0xff] %v514
  %547 = vst [vmem:[%s4 + $0x10] sm:$0xff] %v515
  %548 = vst [vmem:[%s4 + $0x18] sm:$0xff] %v516
  %549 = vst [vmem:[%s4 + $0x20] sm:$0xff] %v517
  %550 = vst [vmem:[%s4 + $0x28] sm:$0xff] %v518
  %551 = vst [vmem:[%s4 + $0x30] sm:$0xff] %v519
  %552 = vst [vmem:[%s4 + $0x38] sm:$0xff] %v520
  %553 = vst [vmem:[%s4 + $0x40] sm:$0xff] %v521
  %554 = vst [vmem:[%s4 + $0x48] sm:$0xff] %v522
  %555 = vst [vmem:[%s4 + $0x50] sm:$0xff] %v523
  %556 = vst [vmem:[%s4 + $0x58] sm:$0xff] %v524
  %557 = vst [vmem:[%s4 + $0x60] sm:$0xff] %v525
  %558 = vst [vmem:[%s4 + $0x68] sm:$0xff] %v526
  %559 = vst [vmem:[%s4 + $0x70] sm:$0xff] %v527
  %560 = vst [vmem:[%s4 + $0x78] sm:$0xff] %v528
  %561 = vst [vmem:[%s4 + $0x80] sm:$0xff] %v529
  %562 = vst [vmem:[%s4 + $0x88] sm:$0xff] %v530
  %563 = vst [vmem:[%s4 + $0x90] sm:$0xff] %v531
  %564 = vst [vmem:[%s4 + $0x98] sm:$0xff] %v532
  %565 = vst [vmem:[%s4 + $0xa0] sm:$0xff] %v533
  %566 = vst [vmem:[%s4 + $0xa8] sm:$0xff] %v534
  %567 = vst [vmem:[%s4 + $0xb0] sm:$0xff] %v535
  %568 = vst [vmem:[%s4 + $0xb8] sm:$0xff] %v536
  %569 = vst [vmem:[%s4 + $0xc0] sm:$0xff] %v537
  %570 = vst [vmem:[%s4 + $0xc8] sm:$0xff] %v538
  %571 = vst [vmem:[%s4 + $0xd0] sm:$0xff] %v539
  %572 = vst [vmem:[%s4 + $0xd8] sm:$0xff] %v540
  %573 = vst [vmem:[%s4 + $0xe0] sm:$0xff] %v541
  %574 = vst [vmem:[%s4 + $0xe8] sm:$0xff] %v542
  %575 = vst [vmem:[%s4 + $0xf0] sm:$0xff] %v543
  %576 = vst [vmem:[%s4 + $0xf8] sm:$0xff] %v544
  // Predicated region
  $region18: #{encoder_forward.1} parent=0 // pred_check
    _
  $region19: #{encoder_forward.1} parent=0 // pred_check_branch
    %578 = sbr.rel (0) target = $region21
  $region20: #{encoder_forward.1} parent=0 // pred_region
    _
  $region21: #{encoder_forward.1} parent=0 // pred_fallthru
    _
  // Predicated region
  $region22: #{encoder_forward.1} parent=0 // pred_check
    _
  $region23: #{encoder_forward.1} parent=0 // pred_check_branch
    %580 = sbr.rel (0) target = $region25
  $region24: #{encoder_forward.1} parent=0 // pred_region
    _
  $region25: #{encoder_forward.1} parent=0 // pred_fallthru
    _

</llo_original>
